<compile_context>
chip_gen: v6e
topology: v6e:2x2x1
jax: 0.10.0
libtpu: 0.0.40
codegen_flags: <defaults>
</compile_context>

<pallas_src>
import jax
import jax.numpy as jnp
from jax import lax
from jax.experimental import pallas as pl
from jax.experimental.pallas import tpu as pltpu


C_IN, C_OUT, KSIZE, STRIDE, PAD = 18, 6, 4, 2, 1
ROWS = 4 * C_OUT            # 24 = (rh, rw, o) phase-major GEMM output rows
KTAPS = 9                   # shared 3x3 window taps
K_RAW = KTAPS * C_IN        # 162
K_PAD = 192                 # zero-padded contraction dim (multiple of 16 for bf16 sublanes)


# ---------------------------------------------------------------------------
# Weight re-layout (hoisted, runs once per weight):
#   phase (rh, rw) of the output uses a 2x2 sub-kernel of the 4x4 transposed-conv
#   kernel; all 4 phases share a 3x3 input window, so we build one (9, 24, 18)
#   tensor W9[tap, phase*C_OUT + o, c] (zero where a tap is unused by a phase).
#   kh = 3 - 2*dh' - rh with dh' = tap_dh - rh  (same along width).
# ---------------------------------------------------------------------------
def prepare_phase_weights(w_t):
    """w_t: (C_IN, C_OUT, 4, 4) PyTorch ConvTranspose2d layout -> (9, 4*C_OUT, C_IN)."""
    c_in, c_out = w_t.shape[0], w_t.shape[1]
    taps = []
    for dh in range(3):
        for dw in range(3):
            rows = []
            for rh in range(2):
                for rw in range(2):
                    dlh, dlw = dh - rh, dw - rw
                    if 0 <= dlh <= 1 and 0 <= dlw <= 1:
                        kh = 3 - 2 * dlh - rh
                        kw = 3 - 2 * dlw - rw
                        rows.append(w_t[:, :, kh, kw].T)              # (C_OUT, C_IN)
                    else:
                        rows.append(jnp.zeros((c_out, c_in), w_t.dtype))
            taps.append(jnp.concatenate(rows, axis=0))                # (4*C_OUT, C_IN)
    return jnp.stack(taps, axis=0).astype(jnp.float32)                # (9, 4*C_OUT, C_IN)


def prepare_merged_weights(w_t):
    """Merge the 9 tap matrices along K and pad: (24, K_PAD) bf16 GEMM LHS."""
    w9 = prepare_phase_weights(w_t)                                   # (9, 24, 18)
    w_mat = jnp.transpose(w9, (1, 0, 2)).reshape(ROWS, K_RAW)         # K index = tap*18 + c
    w_mat = jnp.pad(w_mat, ((0, 0), (0, K_PAD - K_RAW)))              # (24, 192)
    return w_mat.astype(jnp.bfloat16)


# ---------------------------------------------------------------------------
# Fused Pallas kernel (single grid step, whole problem in VMEM):
#   acc(24, N*256) = W(24, 192) @ X(192, N*256)
#   out = sigmoid(where(acc > 0, acc, -0.5*acc) * -1.9)
# Output rows = 24 (mult of 8), lanes = N*256 (mult of 128): unmasked lane-dense stores.
# ---------------------------------------------------------------------------
def _fused_gemm_epilogue(w_mat, rhs):
    rows, kpad = w_mat.shape
    _, lanes = rhs.shape

    def kernel(w_ref, x_ref, o_ref):
        acc = jnp.dot(w_ref[...], x_ref[...], preferred_element_type=jnp.float32)
        leaky = jnp.where(acc > 0, acc, acc * -0.5)
        o_ref[...] = jax.nn.sigmoid(leaky * -1.9).astype(o_ref.dtype)

    return pl.pallas_call(
        kernel,
        out_shape=jax.ShapeDtypeStruct((rows, lanes), jnp.float32),
        grid=(1,),
        in_specs=[
            pl.BlockSpec((rows, kpad), lambda i: (0, 0)),
            pl.BlockSpec((kpad, lanes), lambda i: (0, 0)),
        ],
        out_specs=pl.BlockSpec((rows, lanes), lambda i: (0, 0)),
        compiler_params=pltpu.CompilerParams(
            dimension_semantics=("arbitrary",),   # single step; nothing to shard
        ),
    )(w_mat, rhs)


@jax.jit
def model_forward(x_nchw, w_mat):
    """x_nchw: (N, 18, H, W) -> (N, 6, 2H, 2W), matching the PyTorch module."""
    n, c_in, h, w = x_nchw.shape
    assert c_in == C_IN
    c_out = ROWS // 4
    wp = w + 2                    # padded width (1 col each side)
    m_valid = h * wp              # 252 valid flattened positions per batch slab
    m_pad = 128 * pl.cdiv(m_valid, 128)   # 256: lane-dense slab width per batch
    mflat = (h + 3) * wp          # 306: flattened padded-input length

    # tap offsets of the shared 3x3 window on the flattened padded input
    offs = [dh * wp + dw for dh in range(3) for dw in range(3)]
    # shape-specific safety: the (1,2)/(1,1) padding must make every padded-width
    # 256-wide tap slice stay inside the flattened padded slab (wrap-around columns
    # p in {W, W+1} land in the extra bottom pad rows).
    assert max(offs) + m_pad <= mflat, (max(offs), m_pad, mflat)
    assert m_valid <= m_pad

    # pad 1 row top, 2 rows bottom, 1 col each side; flatten spatial so taps become
    # constant, lane-dense offsets.
    x_pad = jnp.pad(x_nchw, ((0, 0), (0, 0), (1, 2), (1, 1)))
    x_flat = x_pad.reshape(n, c_in, mflat)

    # wrapper-side tap im2col: 9 static lane-dense slices -> (N, 9*C_IN, 256)
    taps = jnp.stack([x_flat[:, :, off:off + m_pad] for off in offs], axis=1)
    rhs = taps.reshape(n, K_RAW, m_pad)
    rhs = jnp.pad(rhs, ((0, 0), (0, K_PAD - K_RAW), (0, 0)))          # K: 162 -> 192
    # fold the batch into the lane dim: (K_PAD, N*256)
    rhs = jnp.transpose(rhs, (1, 0, 2)).reshape(K_PAD, n * m_pad).astype(jnp.bfloat16)

    y = _fused_gemm_epilogue(w_mat, rhs)                              # (24, N*256) f32

    # depth-to-space back to NCHW: rows are (rh, rw, o), lanes are (b, q, p) on padded width.
    y = y.reshape(2, 2, c_out, n, m_pad)[..., :m_valid]               # crop 256 -> 252
    y = y.reshape(2, 2, c_out, n, h, wp)[..., :w]                     # crop padded-width cols
    y = jnp.transpose(y, (3, 2, 4, 0, 5, 1))                          # (N, o, q, rh, p, rw)
    return y.reshape(n, c_out, 2 * h, 2 * w)
    # TODO(synk): writing the interleaved NCHW layout directly from the kernel would need
    # lane-strided stores; the ~48 KB wrapper transpose is cheaper and robust at this size.


# ---------------------------------------------------------------------------
# Pure-JAX reference (dilated-conv formulation of ConvTranspose2d) for a self-check.
# ---------------------------------------------------------------------------
def reference_forward(x_nchw, w_t):
    w_conv = jnp.transpose(w_t[:, :, ::-1, ::-1], (1, 0, 2, 3))   # (C_OUT, C_IN, 4, 4)
    p = KSIZE - 1 - PAD
    y = lax.conv_general_dilated(
        x_nchw, w_conv, window_strides=(1, 1),
        padding=((p, p), (p, p)), lhs_dilation=(STRIDE, STRIDE),
        dimension_numbers=("NCHW", "OIHW", "NCHW"))
    x4 = jnp.where(y > 0, y, y * -0.5)
    return jax.nn.sigmoid(x4 * -1.9)


if __name__ == "__main__":
    key = jax.random.PRNGKey(0)
    kx, kw = jax.random.split(key)

    # Input matching the module: (2, 18, 14, 16)
    x = jax.random.normal(kx, (2, 18, 14, 16), dtype=jnp.float32)

    # Deterministic ConvTranspose2d weight, PyTorch layout (in=18, out=6, 4, 4)
    fan_scale = 1.0 / jnp.sqrt(18.0 * 4.0 * 4.0)
    w_t = jax.random.uniform(kw, (18, 6, 4, 4), dtype=jnp.float32,
                             minval=-fan_scale, maxval=fan_scale)

    w_mat = prepare_merged_weights(w_t)       # hoisted: computed once per weight
    out = model_forward(x, w_mat)
    jax.block_until_ready(out)
    assert out.shape == (2, 6, 28, 32), out.shape

    # Numerical self-check against the dilated-conv reference.  Matmul inputs are bf16
    # (f32 accumulate + f32 epilogue); post-sigmoid errors stay well below 1e-2.
    ref = reference_forward(x, w_t)
    max_err = float(jnp.max(jnp.abs(out - ref)))
    assert max_err < 1e-2, max_err

    print("KERNEL_OK")
</pallas_src>

<mosaic_0001>
module attributes {stable_mosaic.version = 11 : i64} {
  func.func @kernel(%arg0: i32, %arg1: memref<24x192xbf16, #tpu.memory_space<vmem>>, %arg2: memref<192x512xbf16, #tpu.memory_space<vmem>>, %arg3: memref<24x512xf32, #tpu.memory_space<vmem>>) attributes {dimension_semantics = [#tpu.dimension_semantics<arbitrary>], iteration_bounds = array<i64: 1>, scalar_prefetch = 0 : i64, scratch_operands = 0 : i64, tpu.core_type = #tpu.core_type<tc>, window_params = [{pipeline_mode = #tpu.pipeline_mode<synchronous>, transform_indices = @transform_0, window_bounds = array<i64: 24, 192>}, {pipeline_mode = #tpu.pipeline_mode<synchronous>, transform_indices = @transform_1, window_bounds = array<i64: 192, 512>}, {pipeline_mode = #tpu.pipeline_mode<synchronous>, transform_indices = @transform_2, window_bounds = array<i64: 24, 512>}]} {
    %c0 = arith.constant 0 : index
    %c0_0 = arith.constant 0 : index
    %0 = vector.load %arg1[%c0, %c0_0] : memref<24x192xbf16, #tpu.memory_space<vmem>>, vector<24x192xbf16>
    %c0_1 = arith.constant 0 : index
    %c0_2 = arith.constant 0 : index
    %1 = vector.load %arg2[%c0_1, %c0_2] : memref<192x512xbf16, #tpu.memory_space<vmem>>, vector<192x512xbf16>
    %cst = arith.constant dense<0.000000e+00> : vector<24x512xf32>
    %2 = tpu.matmul %0, %1, %cst {dimension_numbers = #tpu.dot_dimension_numbers<[1], [0], [0], [1], [0, 0, 1, 1], [], []>} : vector<24x192xbf16>, vector<192x512xbf16>, vector<24x512xf32> -> vector<24x512xf32>
    %cst_3 = arith.constant 0.000000e+00 : f32
    %3 = vector.broadcast %cst_3 : f32 to vector<24x512xf32>
    %4 = arith.cmpf ogt, %2, %3 : vector<24x512xf32>
    %cst_4 = arith.constant -5.000000e-01 : f32
    %5 = vector.broadcast %cst_4 : f32 to vector<24x512xf32>
    %6 = arith.mulf %2, %5 : vector<24x512xf32>
    %7 = arith.select %4, %2, %6 : vector<24x512xi1>, vector<24x512xf32>
    %cst_5 = arith.constant -1.900000e+00 : f32
    %8 = vector.broadcast %cst_5 : f32 to vector<24x512xf32>
    %9 = arith.mulf %7, %8 : vector<24x512xf32>
    %10 = arith.negf %9 : vector<24x512xf32>
    %11 = math.exp %10 : vector<24x512xf32>
    %cst_6 = arith.constant 1.000000e+00 : f32
    %12 = vector.broadcast %cst_6 : f32 to vector<24x512xf32>
    %13 = arith.addf %12, %11 : vector<24x512xf32>
    %14 = arith.divf %12, %13 : vector<24x512xf32>
    %c0_7 = arith.constant 0 : index
    %c0_8 = arith.constant 0 : index
    %15 = vector.load %arg3[%c0_7, %c0_8] : memref<24x512xf32, #tpu.memory_space<vmem>>, vector<24x512xf32>
    tpu.vector_store %arg3[%c0_7, %c0_8], %14 {strides = array<i32>} : memref<24x512xf32, #tpu.memory_space<vmem>>, vector<24x512xf32>,
    return
  }
  func.func @transform_0(%arg0: i32) -> (i32, i32) {
    %c0_i32 = arith.constant 0 : i32
    %c0_i32_0 = arith.constant 0 : i32
    %c0_i32_1 = arith.constant 0 : i32
    return %c0_i32, %c0_i32_0 : i32, i32
  }
  func.func @transform_1(%arg0: i32) -> (i32, i32) {
    %c0_i32 = arith.constant 0 : i32
    %c0_i32_0 = arith.constant 0 : i32
    %c0_i32_1 = arith.constant 0 : i32
    return %c0_i32, %c0_i32_0 : i32, i32
  }
  func.func @transform_2(%arg0: i32) -> (i32, i32) {
    %c0_i32 = arith.constant 0 : i32
    %c0_i32_0 = arith.constant 0 : i32
    %c0_i32_1 = arith.constant 0 : i32
    return %c0_i32, %c0_i32_0 : i32, i32
  }
}

</mosaic_0001>

<llo_original>
// kernel: model_forward.1
$region0: #{model_forward.1}
  #allocation0 [shape = 'u32[]', space=smem, size = 0x4, offset = 0x4, fixed_abs, tag = 'smem constant byte address 0x4 - core index']
  #allocation1 [shape = 'u32[144,128]{1,0:T(1,128)}', space=vmem, size = 0x12000, scoped, tag = 'internal scratch']
  %s0 = inlined_call_operand.vmem [shape: bf16[24,192], index: 0, kind: input, shape index: {}]
  %s1 = inlined_call_operand.vmem [shape: bf16[192,512], index: 1, kind: input, shape index: {}]
  %s2 = inlined_call_operand.vmem [shape: f32[24,512], index: 2, kind: output, shape index: {}]
  %s3 = sld [smem:[#allocation0]]
  $region18: #{model_forward.1} parent=0
    _
  %s5 = ssub.s32 1, %s3
  %s6 = scalar_select 0, %s5, %s3
  // Predicated region
  $region2: #{model_forward.1} parent=0 // pred_check
    _
  $region3: #{model_forward.1} parent=0 // pred_check_branch
    %8 = sbr.rel (0) target = $region5
  $region4: #{model_forward.1} parent=0 // pred_region
    _
  $region5: #{model_forward.1} parent=0 // pred_fallthru
    _
  // Predicated region
  $region6: #{model_forward.1} parent=0 // pred_check
    _
  $region7: #{model_forward.1} parent=0 // pred_check_branch
    %10 = sbr.rel (0) target = $region9
  $region8: #{model_forward.1} parent=0 // pred_region
    _
  $region9: #{model_forward.1} parent=0 // pred_fallthru
    _
  %v12 = vld [vmem:[%s0] sm:$0xff]
  %v13 = vld [vmem:[%s0 + $0x8] sm:$0xff]
  %v14 = vld [vmem:[%s0 + $0x10] sm:$0xff]
  %v15 = vld [vmem:[%s1] sm:$0xff]
  %v16 = vld [vmem:[%s1 + $0x8] sm:$0xff]
  %v17 = vld [vmem:[%s1 + $0x10] sm:$0xff]
  %v18 = vld [vmem:[%s1 + $0x18] sm:$0xff]
  %v19 = vld [vmem:[%s1 + $0x20] sm:$0xff]
  %v20 = vld [vmem:[%s1 + $0x28] sm:$0xff]
  %v21 = vld [vmem:[%s1 + $0x30] sm:$0xff]
  %v22 = vld [vmem:[%s1 + $0x38] sm:$0xff]
  %v23 = vld [vmem:[%s1 + $0x40] sm:$0xff]
  %v24 = vld [vmem:[%s1 + $0x48] sm:$0xff]
  %v25 = vld [vmem:[%s1 + $0x50] sm:$0xff]
  %v26 = vld [vmem:[%s1 + $0x58] sm:$0xff]
  %v27 = vld [vmem:[%s1 + $0x60] sm:$0xff]
  %v28 = vld [vmem:[%s1 + $0x68] sm:$0xff]
  %v29 = vld [vmem:[%s1 + $0x70] sm:$0xff]
  %v30 = vld [vmem:[%s1 + $0x78] sm:$0xff]
  %v31 = vld [vmem:[%s1 + $0x80] sm:$0xff]
  %v32 = vld [vmem:[%s1 + $0x88] sm:$0xff]
  %v33 = vld [vmem:[%s1 + $0x90] sm:$0xff]
  %v34 = vld [vmem:[%s1 + $0x98] sm:$0xff]
  %v35 = vld [vmem:[%s1 + $0xa0] sm:$0xff]
  %v36 = vld [vmem:[%s1 + $0xa8] sm:$0xff]
  %v37 = vld [vmem:[%s1 + $0xb0] sm:$0xff]
  %v38 = vld [vmem:[%s1 + $0xb8] sm:$0xff]
  %v39 = vld [vmem:[%s1 + $0xc0] sm:$0xff]
  %v40 = vld [vmem:[%s1 + $0xc8] sm:$0xff]
  %v41 = vld [vmem:[%s1 + $0xd0] sm:$0xff]
  %v42 = vld [vmem:[%s1 + $0xd8] sm:$0xff]
  %v43 = vld [vmem:[%s1 + $0xe0] sm:$0xff]
  %v44 = vld [vmem:[%s1 + $0xe8] sm:$0xff]
  %v45 = vld [vmem:[%s1 + $0xf0] sm:$0xff]
  %v46 = vld [vmem:[%s1 + $0xf8] sm:$0xff]
  %v47 = vld [vmem:[%s1 + $0x100] sm:$0xff]
  %v48 = vld [vmem:[%s1 + $0x108] sm:$0xff]
  %v49 = vld [vmem:[%s1 + $0x110] sm:$0xff]
  %v50 = vld [vmem:[%s1 + $0x118] sm:$0xff]
  %v51 = vld [vmem:[%s1 + $0x120] sm:$0xff]
  %v52 = vld [vmem:[%s1 + $0x128] sm:$0xff]
  %v53 = vld [vmem:[%s1 + $0x130] sm:$0xff]
  %v54 = vld [vmem:[%s1 + $0x138] sm:$0xff]
  %v55 = vld [vmem:[%s1 + $0x140] sm:$0xff]
  %v56 = vld [vmem:[%s1 + $0x148] sm:$0xff]
  %v57 = vld [vmem:[%s1 + $0x150] sm:$0xff]
  %v58 = vld [vmem:[%s1 + $0x158] sm:$0xff]
  %v59 = vld [vmem:[%s1 + $0x160] sm:$0xff]
  %v60 = vld [vmem:[%s1 + $0x168] sm:$0xff]
  %v61 = vld [vmem:[%s1 + $0x170] sm:$0xff]
  %v62 = vld [vmem:[%s1 + $0x178] sm:$0xff]
  %v66 = vunpack.c.l.b16 %v12
  %v67 = vunpack.c.h.b16 %v12
  %v68 = vunpack.c.l.b16 %v13
  %v69 = vunpack.c.h.b16 %v13
  %v70 = vunpack.c.l.b16 %v14
  %v71 = vunpack.c.h.b16 %v14
  %v72 = vpack.c.b16 %v68, %v66
  %v73 = vpack.c.b16 %v69, %v67
  %v74 = vpack.c.b16 %v70, %v70
  %v75 = vpack.c.b16 %v71, %v71
  %v126 = vunpack.c.l.b16 %v15
  %v127 = vunpack.c.h.b16 %v15
  %v128 = vunpack.c.l.b16 %v16
  %v129 = vunpack.c.h.b16 %v16
  %v130 = vunpack.c.l.b16 %v17
  %v131 = vunpack.c.h.b16 %v17
  %v132 = vunpack.c.l.b16 %v18
  %v133 = vunpack.c.h.b16 %v18
  %v134 = vunpack.c.l.b16 %v19
  %v135 = vunpack.c.h.b16 %v19
  %v136 = vunpack.c.l.b16 %v20
  %v137 = vunpack.c.h.b16 %v20
  %v138 = vunpack.c.l.b16 %v21
  %v139 = vunpack.c.h.b16 %v21
  %v140 = vunpack.c.l.b16 %v22
  %v141 = vunpack.c.h.b16 %v22
  %v142 = vunpack.c.l.b16 %v23
  %v143 = vunpack.c.h.b16 %v23
  %v144 = vunpack.c.l.b16 %v24
  %v145 = vunpack.c.h.b16 %v24
  %v146 = vunpack.c.l.b16 %v25
  %v147 = vunpack.c.h.b16 %v25
  %v148 = vunpack.c.l.b16 %v26
  %v149 = vunpack.c.h.b16 %v26
  %v150 = vunpack.c.l.b16 %v27
  %v151 = vunpack.c.h.b16 %v27
  %v152 = vunpack.c.l.b16 %v28
  %v153 = vunpack.c.h.b16 %v28
  %v154 = vunpack.c.l.b16 %v29
  %v155 = vunpack.c.h.b16 %v29
  %v156 = vunpack.c.l.b16 %v30
  %v157 = vunpack.c.h.b16 %v30
  %v158 = vunpack.c.l.b16 %v31
  %v159 = vunpack.c.h.b16 %v31
  %v160 = vunpack.c.l.b16 %v32
  %v161 = vunpack.c.h.b16 %v32
  %v162 = vunpack.c.l.b16 %v33
  %v163 = vunpack.c.h.b16 %v33
  %v164 = vunpack.c.l.b16 %v34
  %v165 = vunpack.c.h.b16 %v34
  %v166 = vunpack.c.l.b16 %v35
  %v167 = vunpack.c.h.b16 %v35
  %v168 = vunpack.c.l.b16 %v36
  %v169 = vunpack.c.h.b16 %v36
  %v170 = vunpack.c.l.b16 %v37
  %v171 = vunpack.c.h.b16 %v37
  %v172 = vunpack.c.l.b16 %v38
  %v173 = vunpack.c.h.b16 %v38
  %v174 = vunpack.c.l.b16 %v39
  %v175 = vunpack.c.h.b16 %v39
  %v176 = vunpack.c.l.b16 %v40
  %v177 = vunpack.c.h.b16 %v40
  %v178 = vunpack.c.l.b16 %v41
  %v179 = vunpack.c.h.b16 %v41
  %v180 = vunpack.c.l.b16 %v42
  %v181 = vunpack.c.h.b16 %v42
  %v182 = vunpack.c.l.b16 %v43
  %v183 = vunpack.c.h.b16 %v43
  %v184 = vunpack.c.l.b16 %v44
  %v185 = vunpack.c.h.b16 %v44
  %v186 = vunpack.c.l.b16 %v45
  %v187 = vunpack.c.h.b16 %v45
  %v188 = vunpack.c.l.b16 %v46
  %v189 = vunpack.c.h.b16 %v46
  %v190 = vunpack.c.l.b16 %v47
  %v191 = vunpack.c.h.b16 %v47
  %v192 = vunpack.c.l.b16 %v48
  %v193 = vunpack.c.h.b16 %v48
  %v194 = vunpack.c.l.b16 %v49
  %v195 = vunpack.c.h.b16 %v49
  %v196 = vunpack.c.l.b16 %v50
  %v197 = vunpack.c.h.b16 %v50
  %v198 = vunpack.c.l.b16 %v51
  %v199 = vunpack.c.h.b16 %v51
  %v200 = vunpack.c.l.b16 %v52
  %v201 = vunpack.c.h.b16 %v52
  %v202 = vunpack.c.l.b16 %v53
  %v203 = vunpack.c.h.b16 %v53
  %v204 = vunpack.c.l.b16 %v54
  %v205 = vunpack.c.h.b16 %v54
  %v206 = vunpack.c.l.b16 %v55
  %v207 = vunpack.c.h.b16 %v55
  %v208 = vunpack.c.l.b16 %v56
  %v209 = vunpack.c.h.b16 %v56
  %v210 = vunpack.c.l.b16 %v57
  %v211 = vunpack.c.h.b16 %v57
  %v212 = vunpack.c.l.b16 %v58
  %v213 = vunpack.c.h.b16 %v58
  %v214 = vunpack.c.l.b16 %v59
  %v215 = vunpack.c.h.b16 %v59
  %v216 = vunpack.c.l.b16 %v60
  %v217 = vunpack.c.h.b16 %v60
  %v218 = vunpack.c.l.b16 %v61
  %v219 = vunpack.c.h.b16 %v61
  %v220 = vunpack.c.l.b16 %v62
  %v221 = vunpack.c.h.b16 %v62
  %v222 = vpack.c.b16 %v130, %v126
  %v223 = vpack.c.b16 %v131, %v127
  %v224 = vpack.c.b16 %v132, %v128
  %v225 = vpack.c.b16 %v133, %v129
  %v226 = vpack.c.b16 %v138, %v134
  %v227 = vpack.c.b16 %v139, %v135
  %v228 = vpack.c.b16 %v140, %v136
  %v229 = vpack.c.b16 %v141, %v137
  %v230 = vpack.c.b16 %v146, %v142
  %v231 = vpack.c.b16 %v147, %v143
  %v232 = vpack.c.b16 %v148, %v144
  %v233 = vpack.c.b16 %v149, %v145
  %v234 = vpack.c.b16 %v154, %v150
  %v235 = vpack.c.b16 %v155, %v151
  %v236 = vpack.c.b16 %v156, %v152
  %v237 = vpack.c.b16 %v157, %v153
  %v238 = vpack.c.b16 %v162, %v158
  %v239 = vpack.c.b16 %v163, %v159
  %v240 = vpack.c.b16 %v164, %v160
  %v241 = vpack.c.b16 %v165, %v161
  %v242 = vpack.c.b16 %v170, %v166
  %v243 = vpack.c.b16 %v171, %v167
  %v244 = vpack.c.b16 %v172, %v168
  %v245 = vpack.c.b16 %v173, %v169
  %v246 = vpack.c.b16 %v178, %v174
  %v247 = vpack.c.b16 %v179, %v175
  %v248 = vpack.c.b16 %v180, %v176
  %v249 = vpack.c.b16 %v181, %v177
  %v250 = vpack.c.b16 %v186, %v182
  %v251 = vpack.c.b16 %v187, %v183
  %v252 = vpack.c.b16 %v188, %v184
  %v253 = vpack.c.b16 %v189, %v185
  %v254 = vpack.c.b16 %v194, %v190
  %v255 = vpack.c.b16 %v195, %v191
  %v256 = vpack.c.b16 %v196, %v192
  %v257 = vpack.c.b16 %v197, %v193
  %v258 = vpack.c.b16 %v202, %v198
  %v259 = vpack.c.b16 %v203, %v199
  %v260 = vpack.c.b16 %v204, %v200
  %v261 = vpack.c.b16 %v205, %v201
  %v262 = vpack.c.b16 %v210, %v206
  %v263 = vpack.c.b16 %v211, %v207
  %v264 = vpack.c.b16 %v212, %v208
  %v265 = vpack.c.b16 %v213, %v209
  %v266 = vpack.c.b16 %v218, %v214
  %v267 = vpack.c.b16 %v219, %v215
  %v268 = vpack.c.b16 %v220, %v216
  %v269 = vpack.c.b16 %v221, %v217
  %vm318 = vcmask 523264
  %v320 = vsel %vm318, %v73, 0
  %v323 = vsel %vm318, %v75, 0
  %325 = vmatprep.subr.bf16.mxu0 %v251
  %326 = vmatpush1.bf16.msra.mxu0 %v250
  %327 = vmatprep.subr.bf16.mxu0 %v247
  %328 = vmatpush1.bf16.msra.mxu0 %v246
  %329 = vmatprep.subr.bf16.mxu0 %v243
  %330 = vmatpush1.bf16.msra.mxu0 %v242
  %331 = vmatprep.subr.bf16.mxu0 %v239
  %332 = vmatpush1.bf16.msra.mxu0 %v238
  %333 = vmatprep.subr.bf16.mxu0 %v235
  %334 = vmatpush1.bf16.msra.mxu0 %v234
  %335 = vmatprep.subr.bf16.mxu0 %v231
  %336 = vmatpush1.bf16.msra.mxu0 %v230
  %337 = vmatprep.subr.bf16.mxu0 %v227
  %338 = vmatpush1.bf16.msra.mxu0 %v226
  %339 = vmatprep.subr.bf16.mxu0 %v223
  %340 = vmatpush1.bf16.msra.mxu0 %v222
  %341 = vmatprep.subr.bf16.mxu0 0
  %342 = vmatpush2.bf16.msra.mxu0 0
  %343 = vmatprep.subr.bf16.mxu0 0
  %344 = vmatpush2.bf16.msra.mxu0 0
  %345 = vmatprep.subr.bf16.mxu0 0
  %346 = vmatpush2.bf16.msra.mxu0 0
  %347 = vmatprep.subr.bf16.mxu0 0
  %348 = vmatpush2.bf16.msra.mxu0 0
  %349 = vmatprep.subr.bf16.mxu0 %v267
  %350 = vmatpush2.bf16.msra.mxu0 %v266
  %351 = vmatprep.subr.bf16.mxu0 %v263
  %352 = vmatpush2.bf16.msra.mxu0 %v262
  %353 = vmatprep.subr.bf16.mxu0 %v259
  %354 = vmatpush2.bf16.msra.mxu0 %v258
  %355 = vmatprep.subr.bf16.mxu0 %v255
  %356 = vmatpush2.bf16.msra.mxu0 %v254
  %357 = vmatprep.mubr.bf16.mxu0 %v320
  %358 = vmatmul.mubr.bf16.gmra.mxu0 %v72
  %v359 = vpop.f32.mrf.mxu0
  %v360 = vadd.f32 0.0, %v359
  %v361 = vpop.f32.mrf.mxu0
  %v362 = vadd.f32 0.0, %v361
  %v363 = vpop.f32.mrf.mxu0
  %v364 = vadd.f32 0.0, %v363
  %v365 = vpop.f32.mrf.mxu0
  %v366 = vadd.f32 0.0, %v365
  %367 = vmatprep.mubr.bf16.mxu0 %v323
  %368 = vmatmul.mubr.bf16.gmra.mxu0 %v74
  %v369 = vpop.f32.mrf.mxu0
  %v370 = vadd.f32 0.0, %v369
  %v371 = vpop.f32.mrf.mxu0
  %v372 = vadd.f32 0.0, %v371
  %v373 = vpop.f32.mrf.mxu0
  %v374 = vpop.f32.mrf.mxu0
  %375 = vdwg.mxu0
  %376 = vmatprep.subr.bf16.mxu0 %v253
  %377 = vmatpush1.bf16.msra.mxu0 %v252
  %378 = vmatprep.subr.bf16.mxu0 %v249
  %379 = vmatpush1.bf16.msra.mxu0 %v248
  %380 = vmatprep.subr.bf16.mxu0 %v245
  %381 = vmatpush1.bf16.msra.mxu0 %v244
  %382 = vmatprep.subr.bf16.mxu0 %v241
  %383 = vmatpush1.bf16.msra.mxu0 %v240
  %384 = vmatprep.subr.bf16.mxu0 %v237
  %385 = vmatpush1.bf16.msra.mxu0 %v236
  %386 = vmatprep.subr.bf16.mxu0 %v233
  %387 = vmatpush1.bf16.msra.mxu0 %v232
  %388 = vmatprep.subr.bf16.mxu0 %v229
  %389 = vmatpush1.bf16.msra.mxu0 %v228
  %390 = vmatprep.subr.bf16.mxu0 %v225
  %391 = vmatpush1.bf16.msra.mxu0 %v224
  %392 = vmatprep.subr.bf16.mxu0 0
  %393 = vmatpush2.bf16.msra.mxu0 0
  %394 = vmatprep.subr.bf16.mxu0 0
  %395 = vmatpush2.bf16.msra.mxu0 0
  %396 = vmatprep.subr.bf16.mxu0 0
  %397 = vmatpush2.bf16.msra.mxu0 0
  %398 = vmatprep.subr.bf16.mxu0 0
  %399 = vmatpush2.bf16.msra.mxu0 0
  %400 = vmatprep.subr.bf16.mxu0 %v269
  %401 = vmatpush2.bf16.msra.mxu0 %v268
  %402 = vmatprep.subr.bf16.mxu0 %v265
  %403 = vmatpush2.bf16.msra.mxu0 %v264
  %404 = vmatprep.subr.bf16.mxu0 %v261
  %405 = vmatpush2.bf16.msra.mxu0 %v260
  %406 = vmatprep.subr.bf16.mxu0 %v257
  %407 = vmatpush2.bf16.msra.mxu0 %v256
  %408 = vmatprep.mubr.bf16.mxu0 %v320
  %409 = vmatmul.mubr.bf16.gmra.mxu0 %v72
  %v410 = vpop.f32.mrf.mxu0
  %v411 = vadd.f32 0.0, %v410
  %v412 = vpop.f32.mrf.mxu0
  %v413 = vadd.f32 0.0, %v412
  %v414 = vpop.f32.mrf.mxu0
  %v415 = vadd.f32 0.0, %v414
  %v416 = vpop.f32.mrf.mxu0
  %v417 = vadd.f32 0.0, %v416
  %418 = vmatprep.mubr.bf16.mxu0 %v323
  %419 = vmatmul.mubr.bf16.gmra.mxu0 %v74
  %v420 = vpop.f32.mrf.mxu0
  %v421 = vadd.f32 0.0, %v420
  %v422 = vpop.f32.mrf.mxu0
  %v423 = vadd.f32 0.0, %v422
  %v424 = vpop.f32.mrf.mxu0
  %v425 = vpop.f32.mrf.mxu0
  %426 = vdwg.mxu0
  %vm427 = vcmp.gt.f32.partialorder %v360, 0.0
  %vm428 = vcmp.gt.f32.partialorder %v362, 0.0
  %vm429 = vcmp.gt.f32.partialorder %v411, 0.0
  %vm430 = vcmp.gt.f32.partialorder %v413, 0.0
  %vm431 = vcmp.gt.f32.partialorder %v364, 0.0
  %vm432 = vcmp.gt.f32.partialorder %v366, 0.0
  %vm433 = vcmp.gt.f32.partialorder %v415, 0.0
  %vm434 = vcmp.gt.f32.partialorder %v417, 0.0
  %vm435 = vcmp.gt.f32.partialorder %v370, 0.0
  %vm436 = vcmp.gt.f32.partialorder %v372, 0.0
  %vm437 = vcmp.gt.f32.partialorder %v421, 0.0
  %vm438 = vcmp.gt.f32.partialorder %v423, 0.0
  %v439 = vmul.f32 %v360, -0.5
  %v440 = vmul.f32 %v362, -0.5
  %v441 = vmul.f32 %v411, -0.5
  %v442 = vmul.f32 %v413, -0.5
  %v443 = vmul.f32 %v364, -0.5
  %v444 = vmul.f32 %v366, -0.5
  %v445 = vmul.f32 %v415, -0.5
  %v446 = vmul.f32 %v417, -0.5
  %v447 = vmul.f32 %v370, -0.5
  %v448 = vmul.f32 %v372, -0.5
  %v449 = vmul.f32 %v421, -0.5
  %v450 = vmul.f32 %v423, -0.5
  %v451 = vsel %vm427, %v360, %v439
  %v452 = vsel %vm428, %v362, %v440
  %v453 = vsel %vm429, %v411, %v441
  %v454 = vsel %vm430, %v413, %v442
  %v455 = vsel %vm431, %v364, %v443
  %v456 = vsel %vm432, %v366, %v444
  %v457 = vsel %vm433, %v415, %v445
  %v458 = vsel %vm434, %v417, %v446
  %v459 = vsel %vm435, %v370, %v447
  %v460 = vsel %vm436, %v372, %v448
  %v461 = vsel %vm437, %v421, %v449
  %v462 = vsel %vm438, %v423, %v450
  %v463 = vmul.f32 %v451, -1.9
  %v464 = vmul.f32 %v452, -1.9
  %v465 = vmul.f32 %v453, -1.9
  %v466 = vmul.f32 %v454, -1.9
  %v467 = vmul.f32 %v455, -1.9
  %v468 = vmul.f32 %v456, -1.9
  %v469 = vmul.f32 %v457, -1.9
  %v470 = vmul.f32 %v458, -1.9
  %v471 = vmul.f32 %v459, -1.9
  %v472 = vmul.f32 %v460, -1.9
  %v473 = vmul.f32 %v461, -1.9
  %v474 = vmul.f32 %v462, -1.9
  %v475 = vxor.u32 %v463, 2147483648
  %v476 = vxor.u32 %v464, 2147483648
  %v477 = vxor.u32 %v465, 2147483648
  %v478 = vxor.u32 %v466, 2147483648
  %v479 = vxor.u32 %v467, 2147483648
  %v480 = vxor.u32 %v468, 2147483648
  %v481 = vxor.u32 %v469, 2147483648
  %v482 = vxor.u32 %v470, 2147483648
  %v483 = vxor.u32 %v471, 2147483648
  %v484 = vxor.u32 %v472, 2147483648
  %v485 = vxor.u32 %v473, 2147483648
  %v486 = vxor.u32 %v474, 2147483648
  %v487 = vmul.f32 %v475, 1.442695
  %v488 = vpow.pop %v487
  %v489 = vmul.f32 %v476, 1.442695
  %v490 = vpow.pop %v489
  %v491 = vmul.f32 %v477, 1.442695
  %v492 = vpow.pop %v491
  %v493 = vmul.f32 %v478, 1.442695
  %v494 = vpow.pop %v493
  %v495 = vmul.f32 %v479, 1.442695
  %v496 = vpow.pop %v495
  %v497 = vmul.f32 %v480, 1.442695
  %v498 = vpow.pop %v497
  %v499 = vmul.f32 %v481, 1.442695
  %v500 = vpow.pop %v499
  %v501 = vmul.f32 %v482, 1.442695
  %v502 = vpow.pop %v501
  %v503 = vmul.f32 %v483, 1.442695
  %v504 = vpow.pop %v503
  %v505 = vmul.f32 %v484, 1.442695
  %v506 = vpow.pop %v505
  %v507 = vmul.f32 %v485, 1.442695
  %v508 = vpow.pop %v507
  %v509 = vmul.f32 %v486, 1.442695
  %v510 = vpow.pop %v509
  %v511 = vadd.f32 %v488, 1.0
  %v512 = vadd.f32 %v490, 1.0
  %v513 = vadd.f32 %v492, 1.0
  %v514 = vadd.f32 %v494, 1.0
  %v515 = vadd.f32 %v496, 1.0
  %v516 = vadd.f32 %v498, 1.0
  %v517 = vadd.f32 %v500, 1.0
  %v518 = vadd.f32 %v502, 1.0
  %v519 = vadd.f32 %v504, 1.0
  %v520 = vadd.f32 %v506, 1.0
  %v521 = vadd.f32 %v508, 1.0
  %v522 = vadd.f32 %v510, 1.0
  %v523 = vrcp.pop %v511
  %v524 = vmul.f32 1.0, %v523
  %v525 = vrcp.pop %v512
  %v526 = vmul.f32 1.0, %v525
  %v527 = vrcp.pop %v513
  %v528 = vmul.f32 1.0, %v527
  %v529 = vrcp.pop %v514
  %v530 = vmul.f32 1.0, %v529
  %v531 = vrcp.pop %v515
  %v532 = vmul.f32 1.0, %v531
  %v533 = vrcp.pop %v516
  %v534 = vmul.f32 1.0, %v533
  %v535 = vrcp.pop %v517
  %v536 = vmul.f32 1.0, %v535
  %v537 = vrcp.pop %v518
  %v538 = vmul.f32 1.0, %v537
  %v539 = vrcp.pop %v519
  %v540 = vmul.f32 1.0, %v539
  %v541 = vrcp.pop %v520
  %v542 = vmul.f32 1.0, %v541
  %v543 = vrcp.pop %v521
  %v544 = vmul.f32 1.0, %v543
  %v545 = vrcp.pop %v522
  %v546 = vmul.f32 1.0, %v545
  %547 = vst [vmem:[%s2] sm:$0xff] %v524
  %548 = vst [vmem:[%s2 + $0x8] sm:$0xff] %v526
  %549 = vst [vmem:[%s2 + $0x10] sm:$0xff] %v528
  %550 = vst [vmem:[%s2 + $0x18] sm:$0xff] %v530
  %551 = vst [vmem:[%s2 + $0x20] sm:$0xff] %v532
  %552 = vst [vmem:[%s2 + $0x28] sm:$0xff] %v534
  %553 = vst [vmem:[%s2 + $0x30] sm:$0xff] %v536
  %554 = vst [vmem:[%s2 + $0x38] sm:$0xff] %v538
  %555 = vst [vmem:[%s2 + $0x40] sm:$0xff] %v540
  %556 = vst [vmem:[%s2 + $0x48] sm:$0xff] %v542
  %557 = vst [vmem:[%s2 + $0x50] sm:$0xff] %v544
  %558 = vst [vmem:[%s2 + $0x58] sm:$0xff] %v546
  // Predicated region
  $region10: #{model_forward.1} parent=0 // pred_check
    _
  $region11: #{model_forward.1} parent=0 // pred_check_branch
    %560 = sbr.rel (0) target = $region13
  $region12: #{model_forward.1} parent=0 // pred_region
    _
  $region13: #{model_forward.1} parent=0 // pred_fallthru
    _
  // Predicated region
  $region14: #{model_forward.1} parent=0 // pred_check
    _
  $region15: #{model_forward.1} parent=0 // pred_check_branch
    %562 = sbr.rel (0) target = $region17
  $region16: #{model_forward.1} parent=0 // pred_region
    _
  $region17: #{model_forward.1} parent=0 // pred_fallthru
    _

</llo_original>
